<compile_context>
chip_gen: v7x
topology: tpu7x:2x2x1
jax: 0.10.0
libtpu: 0.0.40
codegen_flags: <defaults>
</compile_context>

<pallas_src>
import jax
import jax.numpy as jnp
from jax.experimental import pallas as pl
from jax.experimental.pallas import tpu as pltpu


def _round_up(x: int, m: int) -> int:
    return (x + m - 1) // m * m


# ---------------------------------------------------------------------------
# Kernel: one [tm, td] tile of   y = -0.5 * (G @ v - 3 * v)   over k tiles.
# grid = (j: D tiles, i: row tiles, k: reduction tiles), k last.
# ---------------------------------------------------------------------------
def _affine_gconv_kernel(g_ref, xk_ref, out_ref, acc_ref):
    i = pl.program_id(1)
    k = pl.program_id(2)

    @pl.when(k == 0)
    def _init():
        acc_ref[...] = jnp.zeros_like(acc_ref)

    # MXU matmul in the graph's compute dtype (bf16 path: both operands bf16,
    # f32 accumulation).  Casting the small RHS tile in-kernel keeps the exact
    # f32 copy available for the affine fold below.
    acc_ref[...] += jnp.dot(
        g_ref[...],
        xk_ref[...].astype(g_ref.dtype),
        preferred_element_type=jnp.float32,
    )

    # Fold the identity term.  Since tm == tk, the k == i block's RHS rows are
    # exactly rows i..i+tm of v:  acc -> (G @ v)_i - 3 * v_i.
    @pl.when(k == i)
    def _diag():
        acc_ref[...] -= 3.0 * xk_ref[...].astype(jnp.float32)

    @pl.when(k == pl.num_programs(2) - 1)
    def _finalize():
        out_ref[...] = (-0.5 * acc_ref[...]).astype(out_ref.dtype)


def _affine_pass(graph_p, v_p, tm, tk, td, vmem_limit_bytes):
    """One pass: y = 1.5*v - 0.5*(G @ v), tiled (td lanes x tm rows x tk red)."""
    npad, dpad = v_p.shape
    grid = (dpad // td, npad // tm, npad // tk)

    return pl.pallas_call(
        _affine_gconv_kernel,
        out_shape=jax.ShapeDtypeStruct((npad, dpad), v_p.dtype),
        grid_spec=pltpu.PrefetchScalarGridSpec(
            num_scalar_prefetch=0,
            grid=grid,
            in_specs=[
                # graph tile for the (i, k) block of the matmul (dominant stream)
                pl.BlockSpec((tm, tk), lambda j, i, k: (i, k)),
                # v rows k..k+tk, feature tile j (matmul RHS + diagonal fold)
                pl.BlockSpec((tk, td), lambda j, i, k: (k, j)),
            ],
            out_specs=pl.BlockSpec((tm, td), lambda j, i, k: (i, j)),
            scratch_shapes=[pltpu.VMEM((tm, td), jnp.float32)],
        ),
        compiler_params=pltpu.CompilerParams(
            # D tiles and row tiles are independent (megacore); k is the
            # reduction and stays last.
            dimension_semantics=("parallel", "parallel", "arbitrary"),
            vmem_limit_bytes=vmem_limit_bytes,
        ),
    )(graph_p, v_p)


# ---------------------------------------------------------------------------
# Tile / VMEM sizing.
# ---------------------------------------------------------------------------
def _vmem_capacity_bytes() -> int:
    """Physical VMEM of the current chip (fallback: v7x's 64 MiB floor)."""
    try:
        cap = int(getattr(pltpu.get_tpu_info(), "vmem_capacity_bytes"))
        if cap > 0:
            return cap
    except Exception:
        pass
    return 64 * 1024 * 1024


def _vmem_estimate(tm, tk, td, graph_bytes, x_bytes):
    graph_tile = tm * tk * graph_bytes * 2   # double-buffered graph input
    xk_tile = tk * td * x_bytes * 2          # double-buffered RHS input
    out_tile = tm * td * x_bytes * 2         # double-buffered output
    acc = tm * td * 4                        # f32 accumulator scratch
    return graph_tile + xk_tile + out_tile + acc


def _pick_tiles(n: int, dpad: int, graph_bytes: int, x_bytes: int):
    """Pick (tm == tk, td, vmem_limit_bytes) from the chip's VMEM capacity."""
    cap = _vmem_capacity_bytes()
    pick_budget = cap // 2                   # conservative: ~32 MiB on v7x, ~64 MiB on v5e/v6e

    # Feature tile: largest divisor of dpad among 512/256/128 (dpad is padded
    # to a multiple of 256 when D > 128, keeping the 256-wide MXU columns fed).
    if dpad % 512 == 0:
        td = 512
    elif dpad % 256 == 0:
        td = 256
    else:
        td = dpad                            # dpad == 128

    npad0 = _round_up(n, 128)
    tm = 128
    for t in (2048, 1024, 512, 256, 128):
        if npad0 % t != 0:
            continue
        if _vmem_estimate(t, t, td, graph_bytes, x_bytes) <= pick_budget:
            tm = t
            break

    est = _vmem_estimate(tm, tm, td, graph_bytes, x_bytes)
    # Lift the scoped-VMEM default but leave headroom below physical capacity.
    vmem_limit = min(int(cap * 0.85), max(2 * est, 32 * 1024 * 1024))
    return tm, td, vmem_limit


# ---------------------------------------------------------------------------
# Public wrapper.
# ---------------------------------------------------------------------------
def contrastive_graph_conv(
    x: jax.Array,
    graph: jax.Array,
    *,
    graph_matmul_dtype=jnp.bfloat16,
) -> jax.Array:
    """x: [N, D], graph: [N, N] -> (1.5*I - 0.5*graph)^2 @ x.

    graph_matmul_dtype controls the MXU / graph-stream dtype.  bf16 (default)
    halves the O(N^2) HBM traffic and hits the fast MXU path with f32
    accumulation; pass jnp.float32 for the module's exact f32 semantics.
    """
    n, d = x.shape
    assert graph.shape == (n, n), "graph must be square and match input rows"

    graph_bytes = jnp.dtype(graph_matmul_dtype).itemsize
    x_bytes = jnp.dtype(x.dtype).itemsize

    # Lane-dense feature axis (multiple of 256 once D > 128, for the 256-wide
    # v6e/v7x MXU) and tile-aligned node axis.
    dpad = 128 if d <= 128 else _round_up(d, 256)
    tm, td, vmem_limit = _pick_tiles(n, dpad, graph_bytes, x_bytes)
    npad = _round_up(n, tm)

    # Prepass: cast BEFORE padding (halves the pad copy's bytes for bf16) and
    # skip both when already aligned / already the right dtype.
    graph_c = graph if graph.dtype == graph_matmul_dtype else graph.astype(graph_matmul_dtype)
    if npad != n:
        graph_p = jnp.pad(graph_c, ((0, npad - n), (0, npad - n)))
    else:
        graph_p = graph_c
    if npad != n or dpad != d:
        x_p = jnp.pad(x, ((0, npad - n), (0, dpad - d)))
    else:
        x_p = x

    # out = A @ (A @ x) as two affine graph passes (cheap [N, D] HBM round-trip).
    y1 = _affine_pass(graph_p, x_p, tm, tm, td, vmem_limit)
    out_p = _affine_pass(graph_p, y1, tm, tm, td, vmem_limit)

    return out_p[:n, :d]


# ---------------------------------------------------------------------------
# Reference + self-test.
# ---------------------------------------------------------------------------
def _reference(x: jnp.ndarray, graph: jnp.ndarray) -> jnp.ndarray:
    s, m = 0.5, 2
    n = graph.shape[1]
    eye = jnp.eye(n, dtype=graph.dtype)
    L = eye - graph
    a = eye + s * L
    c = jnp.linalg.matrix_power(a, m)
    return c @ x


if __name__ == "__main__":
    key = jax.random.PRNGKey(0)
    k1, k2 = jax.random.split(key)

    N = 64   # number of graph nodes
    D = 32   # feature dimension

    x = jax.random.normal(k1, (N, D), dtype=jnp.float32)
    # Row-stochastic-ish synthetic adjacency/graph matrix.
    raw = jax.random.uniform(k2, (N, N), dtype=jnp.float32)
    graph = raw / jnp.sum(raw, axis=1, keepdims=True)

    ref = _reference(x, graph)

    # Exact-semantics (f32) path.
    out_f32 = contrastive_graph_conv(x, graph, graph_matmul_dtype=jnp.float32)
    jax.block_until_ready(out_f32)
    assert out_f32.shape == (N, D)
    assert jnp.allclose(out_f32, ref, atol=1e-4, rtol=1e-4), (
        float(jnp.max(jnp.abs(out_f32 - ref)))
    )

    # Fast (default bf16-graph) path: half the HBM traffic, bf16 MXU, f32 accum.
    out_bf16 = contrastive_graph_conv(x, graph)
    jax.block_until_ready(out_bf16)
    assert out_bf16.shape == (N, D)
    assert jnp.allclose(out_bf16, ref, atol=5e-2, rtol=5e-2), (
        float(jnp.max(jnp.abs(out_bf16 - ref)))
    )

    print("KERNEL_OK")
</pallas_src>

<mosaic_0001>
module attributes {stable_mosaic.version = 11 : i64} {
  func.func @_affine_gconv_kernel(%arg0: i32, %arg1: i32, %arg2: i32, %arg3: memref<128x128xf32, #tpu.memory_space<vmem>>, %arg4: memref<128x128xf32, #tpu.memory_space<vmem>>, %arg5: memref<128x128xf32, #tpu.memory_space<vmem>>, %arg6: memref<128x128xf32, #tpu.memory_space<vmem>>) attributes {dimension_semantics = [#tpu.dimension_semantics<parallel>, #tpu.dimension_semantics<parallel>, #tpu.dimension_semantics<arbitrary>], iteration_bounds = array<i64: 1, 1, 1>, scalar_prefetch = 0 : i64, scratch_operands = 1 : i64, tpu.core_type = #tpu.core_type<tc>, window_params = [{transform_indices = @transform_0, window_bounds = array<i64: 128, 128>}, {transform_indices = @transform_1, window_bounds = array<i64: 128, 128>}, {transform_indices = @transform_2, window_bounds = array<i64: 128, 128>}]} {
    %c0_i32 = arith.constant 0 : i32
    %0 = arith.cmpi eq, %arg2, %c0_i32 : i32
    %1 = arith.extui %0 : i1 to i32
    %c0_i32_0 = arith.constant 0 : i32
    %2 = arith.cmpi ne, %1, %c0_i32_0 : i32
    scf.if %2 {
      %cst_11 = arith.constant 0.000000e+00 : f32
      %15 = vector.broadcast %cst_11 : f32 to vector<128x128xf32>
      %c0_12 = arith.constant 0 : index
      %c0_13 = arith.constant 0 : index
      %16 = vector.load %arg6[%c0_12, %c0_13] : memref<128x128xf32, #tpu.memory_space<vmem>>, vector<128x128xf32>
      tpu.vector_store %arg6[%c0_12, %c0_13], %15 {strides = array<i32>} : memref<128x128xf32, #tpu.memory_space<vmem>>, vector<128x128xf32>,
    } else {
    }
    %c0 = arith.constant 0 : index
    %c0_1 = arith.constant 0 : index
    %3 = vector.load %arg6[%c0, %c0_1] : memref<128x128xf32, #tpu.memory_space<vmem>>, vector<128x128xf32>
    %c0_2 = arith.constant 0 : index
    %c0_3 = arith.constant 0 : index
    %4 = vector.load %arg3[%c0_2, %c0_3] : memref<128x128xf32, #tpu.memory_space<vmem>>, vector<128x128xf32>
    %c0_4 = arith.constant 0 : index
    %c0_5 = arith.constant 0 : index
    %5 = vector.load %arg4[%c0_4, %c0_5] : memref<128x128xf32, #tpu.memory_space<vmem>>, vector<128x128xf32>
    %cst = arith.constant dense<0.000000e+00> : vector<128x128xf32>
    %6 = tpu.matmul %4, %5, %cst {dimension_numbers = #tpu.dot_dimension_numbers<[1], [0], [0], [1], [0, 0, 1, 1], [], []>} : vector<128x128xf32>, vector<128x128xf32>, vector<128x128xf32> -> vector<128x128xf32>
    %7 = arith.addf %3, %6 : vector<128x128xf32>
    %c0_6 = arith.constant 0 : index
    %c0_7 = arith.constant 0 : index
    %8 = vector.load %arg6[%c0_6, %c0_7] : memref<128x128xf32, #tpu.memory_space<vmem>>, vector<128x128xf32>
    tpu.vector_store %arg6[%c0_6, %c0_7], %7 {strides = array<i32>} : memref<128x128xf32, #tpu.memory_space<vmem>>, vector<128x128xf32>,
    %9 = arith.cmpi eq, %arg2, %arg1 : i32
    %10 = arith.extui %9 : i1 to i32
    %c0_i32_8 = arith.constant 0 : i32
    %11 = arith.cmpi ne, %10, %c0_i32_8 : i32
    scf.if %11 {
      %c0_11 = arith.constant 0 : index
      %c0_12 = arith.constant 0 : index
      %15 = vector.load %arg6[%c0_11, %c0_12] : memref<128x128xf32, #tpu.memory_space<vmem>>, vector<128x128xf32>
      %c0_13 = arith.constant 0 : index
      %c0_14 = arith.constant 0 : index
      %16 = vector.load %arg4[%c0_13, %c0_14] : memref<128x128xf32, #tpu.memory_space<vmem>>, vector<128x128xf32>
      %cst_15 = arith.constant 3.000000e+00 : f32
      %17 = vector.broadcast %cst_15 : f32 to vector<128x128xf32>
      %18 = arith.mulf %17, %16 : vector<128x128xf32>
      %19 = arith.subf %15, %18 : vector<128x128xf32>
      %c0_16 = arith.constant 0 : index
      %c0_17 = arith.constant 0 : index
      %20 = vector.load %arg6[%c0_16, %c0_17] : memref<128x128xf32, #tpu.memory_space<vmem>>, vector<128x128xf32>
      tpu.vector_store %arg6[%c0_16, %c0_17], %19 {strides = array<i32>} : memref<128x128xf32, #tpu.memory_space<vmem>>, vector<128x128xf32>,
    } else {
    }
    %c0_i32_9 = arith.constant 0 : i32
    %12 = arith.cmpi eq, %arg2, %c0_i32_9 : i32
    %13 = arith.extui %12 : i1 to i32
    %c0_i32_10 = arith.constant 0 : i32
    %14 = arith.cmpi ne, %13, %c0_i32_10 : i32
    scf.if %14 {
      %c0_11 = arith.constant 0 : index
      %c0_12 = arith.constant 0 : index
      %15 = vector.load %arg6[%c0_11, %c0_12] : memref<128x128xf32, #tpu.memory_space<vmem>>, vector<128x128xf32>
      %cst_13 = arith.constant -5.000000e-01 : f32
      %16 = vector.broadcast %cst_13 : f32 to vector<128x128xf32>
      %17 = arith.mulf %16, %15 : vector<128x128xf32>
      %c0_14 = arith.constant 0 : index
      %c0_15 = arith.constant 0 : index
      %18 = vector.load %arg5[%c0_14, %c0_15] : memref<128x128xf32, #tpu.memory_space<vmem>>, vector<128x128xf32>
      tpu.vector_store %arg5[%c0_14, %c0_15], %17 {strides = array<i32>} : memref<128x128xf32, #tpu.memory_space<vmem>>, vector<128x128xf32>,
    } else {
    }
    return
  }
  func.func @transform_0(%arg0: i32, %arg1: i32, %arg2: i32) -> (i32, i32) {
    %c0_i32 = arith.constant 0 : i32
    return %arg1, %arg2 : i32, i32
  }
  func.func @transform_1(%arg0: i32, %arg1: i32, %arg2: i32) -> (i32, i32) {
    %c0_i32 = arith.constant 0 : i32
    return %arg2, %arg0 : i32, i32
  }
  func.func @transform_2(%arg0: i32, %arg1: i32, %arg2: i32) -> (i32, i32) {
    %c0_i32 = arith.constant 0 : i32
    return %arg1, %arg0 : i32, i32
  }
}

</mosaic_0001>

<llo_original>
// kernel: tpu_custom_call.1
$region0: #{tpu_custom_call.1}
  #allocation0 [shape = 'u32[]', space=smem, size = 0x4, offset = 0x4, fixed_abs, tag = 'smem constant byte address 0x4 - core index']
  #allocation1 [shape = 'u32[144,128]{1,0:T(1,128)}', space=vmem, size = 0x12000, scoped, tag = 'internal scratch']
  #allocation2 [shape = 'f32[128,128]{1,0:T(8,128)}', space=vmem, size = 0x10000, scoped, tag = 'scratch operand']
  %s0 = inlined_call_operand.hbm [shape: f32[128,128], index: 0, kind: input, shape index: {}]
  %s1 = inlined_call_operand.hbm [shape: f32[128,128], index: 1, kind: input, shape index: {}]
  %s2 = inlined_call_operand.hbm [shape: f32[128,128], index: 2, kind: output, shape index: {}]
  %s3 = sld [smem:[#allocation0]]
  $region38: #{tpu_custom_call.1} parent=0
    _
  %s5 = ssub.s32 1, %s3
  %s6 = scalar_select 0, %s5, %s3
  $region1: #{tpu_custom_call.1} parent=0
    #allocation3 [shape = 'u8[65536]{0}', space=vmem, size = 0x10000, scoped, tag = 'input window, operand 0, single buffered']
    #allocation4 [shape = 's32[1]{0}', space=sflag, size = 0x4, scoped, tag = 'scoped memory for tpu_custom_call.1']
    #allocation5 [shape = 's32[1]{0}', space=sflag, size = 0x4, scoped, tag = 'scoped memory for tpu_custom_call.1']
    #allocation6 [shape = 'u8[65536]{0}', space=vmem, size = 0x10000, scoped, tag = 'input window, operand 1, single buffered']
    #allocation7 [shape = 's32[1]{0}', space=sflag, size = 0x4, scoped, tag = 'scoped memory for tpu_custom_call.1']
    #allocation8 [shape = 'u8[65536]{0}', space=vmem, size = 0x10000, scoped, tag = 'output window, operand 0, single buffered']
    %7 = vsyncpa [#allocation4], 0
    %8 = vsyncpa [#allocation7], 0
    %9 = vsyncpa [#allocation5], 0
    // Predicated region
    $region2: #{tpu_custom_call.1} parent=1 // pred_check
      _
    $region3: #{tpu_custom_call.1} parent=1 // pred_check_branch
      %11 = sbr.rel (0) target = $region5
    $region4: #{tpu_custom_call.1} parent=1 // pred_region
      %s13 = ssub.s32 2048, 2048
      %14 = vsyncadd [#allocation4], %s13
      %s15 = sshll.u32 [#allocation3], 4
      %s16 = int_to_ptr.vmem [resolvable:$true] %s15
      %21 = dma.hbm_to_vmem [thread:$0]  %s0, 2048, %s16, [#allocation4], 128, 128, 8
    $region5: #{tpu_custom_call.1} parent=1 // pred_fallthru
      _
    // Predicated region
    $region6: #{tpu_custom_call.1} parent=1 // pred_check
      _
    $region7: #{tpu_custom_call.1} parent=1 // pred_check_branch
      %23 = sbr.rel (0) target = $region9
    $region8: #{tpu_custom_call.1} parent=1 // pred_region
      %s25 = ssub.s32 2048, 2048
      %26 = vsyncadd [#allocation7], %s25
      %s27 = sshll.u32 [#allocation6], 4
      %s28 = int_to_ptr.vmem [resolvable:$true] %s27
      %33 = dma.hbm_to_vmem [thread:$0]  %s1, 2048, %s28, [#allocation7], 128, 128, 8
    $region9: #{tpu_custom_call.1} parent=1 // pred_fallthru
      _
    // Predicated region
    $region10: #{tpu_custom_call.1} parent=1 // pred_check
      _
    $region11: #{tpu_custom_call.1} parent=1 // pred_check_branch
      %35 = sbr.rel (0) target = $region13
    $region12: #{tpu_custom_call.1} parent=1 // pred_region
      %36 = dma.done [#allocation4], 2048
    $region13: #{tpu_custom_call.1} parent=1 // pred_fallthru
      _
    // Predicated region
    $region14: #{tpu_custom_call.1} parent=1 // pred_check
      _
    $region15: #{tpu_custom_call.1} parent=1 // pred_check_branch
      %38 = sbr.rel (0) target = $region17
    $region16: #{tpu_custom_call.1} parent=1 // pred_region
      %39 = dma.done [#allocation7], 2048
    $region17: #{tpu_custom_call.1} parent=1 // pred_fallthru
      _
    %p40 = scmp.eq.s32.totalorder 0, 0
    // Predicated region
    $region18: #{tpu_custom_call.1} parent=1 // pred_check
      %p41 = pneg %p40
    $region19: #{tpu_custom_call.1} parent=1 // pred_check_branch
      %43 = sbr.rel (%p41) target = $region21
    $region20: #{tpu_custom_call.1} parent=1 // pred_region
      %44 = vst [vmem:[#allocation2] sm:$0xff] 0.0
      %45 = vst [vmem:[#allocation2 + $0x8] sm:$0xff] 0.0
      %46 = vst [vmem:[#allocation2 + $0x10] sm:$0xff] 0.0
      %47 = vst [vmem:[#allocation2 + $0x18] sm:$0xff] 0.0
      %48 = vst [vmem:[#allocation2 + $0x20] sm:$0xff] 0.0
      %49 = vst [vmem:[#allocation2 + $0x28] sm:$0xff] 0.0
      %50 = vst [vmem:[#allocation2 + $0x30] sm:$0xff] 0.0
      %51 = vst [vmem:[#allocation2 + $0x38] sm:$0xff] 0.0
      %52 = vst [vmem:[#allocation2 + $0x40] sm:$0xff] 0.0
      %53 = vst [vmem:[#allocation2 + $0x48] sm:$0xff] 0.0
      %54 = vst [vmem:[#allocation2 + $0x50] sm:$0xff] 0.0
      %55 = vst [vmem:[#allocation2 + $0x58] sm:$0xff] 0.0
      %56 = vst [vmem:[#allocation2 + $0x60] sm:$0xff] 0.0
      %57 = vst [vmem:[#allocation2 + $0x68] sm:$0xff] 0.0
      %58 = vst [vmem:[#allocation2 + $0x70] sm:$0xff] 0.0
      %59 = vst [vmem:[#allocation2 + $0x78] sm:$0xff] 0.0
    $region21: #{tpu_custom_call.1} parent=1 // pred_fallthru
      _
    %v60 = vld [vmem:[#allocation2] sm:$0xff]
    %v61 = vld [vmem:[#allocation2 + $0x8] sm:$0xff]
    %v62 = vld [vmem:[#allocation2 + $0x10] sm:$0xff]
    %v63 = vld [vmem:[#allocation2 + $0x18] sm:$0xff]
    %v64 = vld [vmem:[#allocation2 + $0x20] sm:$0xff]
    %v65 = vld [vmem:[#allocation2 + $0x28] sm:$0xff]
    %v66 = vld [vmem:[#allocation2 + $0x30] sm:$0xff]
    %v67 = vld [vmem:[#allocation2 + $0x38] sm:$0xff]
    %v68 = vld [vmem:[#allocation2 + $0x40] sm:$0xff]
    %v69 = vld [vmem:[#allocation2 + $0x48] sm:$0xff]
    %v70 = vld [vmem:[#allocation2 + $0x50] sm:$0xff]
    %v71 = vld [vmem:[#allocation2 + $0x58] sm:$0xff]
    %v72 = vld [vmem:[#allocation2 + $0x60] sm:$0xff]
    %v73 = vld [vmem:[#allocation2 + $0x68] sm:$0xff]
    %v74 = vld [vmem:[#allocation2 + $0x70] sm:$0xff]
    %v75 = vld [vmem:[#allocation2 + $0x78] sm:$0xff]
    %v76 = vld [vmem:[#allocation3] sm:$0xff]
    %v77 = vld [vmem:[#allocation3 + $0x8] sm:$0xff]
    %v78 = vld [vmem:[#allocation3 + $0x10] sm:$0xff]
    %v79 = vld [vmem:[#allocation3 + $0x18] sm:$0xff]
    %v80 = vld [vmem:[#allocation3 + $0x20] sm:$0xff]
    %v81 = vld [vmem:[#allocation3 + $0x28] sm:$0xff]
    %v82 = vld [vmem:[#allocation3 + $0x30] sm:$0xff]
    %v83 = vld [vmem:[#allocation3 + $0x38] sm:$0xff]
    %v84 = vld [vmem:[#allocation3 + $0x40] sm:$0xff]
    %v85 = vld [vmem:[#allocation3 + $0x48] sm:$0xff]
    %v86 = vld [vmem:[#allocation3 + $0x50] sm:$0xff]
    %v87 = vld [vmem:[#allocation3 + $0x58] sm:$0xff]
    %v88 = vld [vmem:[#allocation3 + $0x60] sm:$0xff]
    %v89 = vld [vmem:[#allocation3 + $0x68] sm:$0xff]
    %v90 = vld [vmem:[#allocation3 + $0x70] sm:$0xff]
    %v91 = vld [vmem:[#allocation3 + $0x78] sm:$0xff]
    %v92 = vld [vmem:[#allocation6] sm:$0xff]
    %v93 = vld [vmem:[#allocation6 + $0x8] sm:$0xff]
    %v94 = vld [vmem:[#allocation6 + $0x10] sm:$0xff]
    %v95 = vld [vmem:[#allocation6 + $0x18] sm:$0xff]
    %v96 = vld [vmem:[#allocation6 + $0x20] sm:$0xff]
    %v97 = vld [vmem:[#allocation6 + $0x28] sm:$0xff]
    %v98 = vld [vmem:[#allocation6 + $0x30] sm:$0xff]
    %v99 = vld [vmem:[#allocation6 + $0x38] sm:$0xff]
    %v100 = vld [vmem:[#allocation6 + $0x40] sm:$0xff]
    %v101 = vld [vmem:[#allocation6 + $0x48] sm:$0xff]
    %v102 = vld [vmem:[#allocation6 + $0x50] sm:$0xff]
    %v103 = vld [vmem:[#allocation6 + $0x58] sm:$0xff]
    %v104 = vld [vmem:[#allocation6 + $0x60] sm:$0xff]
    %v105 = vld [vmem:[#allocation6 + $0x68] sm:$0xff]
    %v106 = vld [vmem:[#allocation6 + $0x70] sm:$0xff]
    %v107 = vld [vmem:[#allocation6 + $0x78] sm:$0xff]
    %108 = vmatprep.subr.mxu0 0.0
    %109 = vmatpush1.msra.mxu0 %v92
    %110 = vmatprep.subr.mxu0 0.0
    %111 = vmatpush1.msra.mxu0 %v93
    %112 = vmatprep.subr.mxu0 0.0
    %113 = vmatpush1.msra.mxu0 %v94
    %114 = vmatprep.subr.mxu0 0.0
    %115 = vmatpush1.msra.mxu0 %v95
    %116 = vmatprep.subr.mxu0 0.0
    %117 = vmatpush1.msra.mxu0 %v96
    %118 = vmatprep.subr.mxu0 0.0
    %119 = vmatpush1.msra.mxu0 %v97
    %120 = vmatprep.subr.mxu0 0.0
    %121 = vmatpush1.msra.mxu0 %v98
    %122 = vmatprep.subr.mxu0 0.0
    %123 = vmatpush1.msra.mxu0 %v99
    %124 = vmatprep.subr.mxu0 0.0
    %125 = vmatpush1.msra.mxu0 %v100
    %126 = vmatprep.subr.mxu0 0.0
    %127 = vmatpush1.msra.mxu0 %v101
    %128 = vmatprep.subr.mxu0 0.0
    %129 = vmatpush1.msra.mxu0 %v102
    %130 = vmatprep.subr.mxu0 0.0
    %131 = vmatpush1.msra.mxu0 %v103
    %132 = vmatprep.subr.mxu0 0.0
    %133 = vmatpush1.msra.mxu0 %v104
    %134 = vmatprep.subr.mxu0 0.0
    %135 = vmatpush1.msra.mxu0 %v105
    %136 = vmatprep.subr.mxu0 0.0
    %137 = vmatpush1.msra.mxu0 %v106
    %138 = vmatprep.subr.mxu0 0.0
    %139 = vmatpush1.msra.mxu0 %v107
    %140 = vmatprep.subr.mxu0 0.0
    %141 = vmatpush1.msra.mxu0 0.0
    %142 = vmatprep.subr.mxu0 0.0
    %143 = vmatpush1.msra.mxu0 0.0
    %144 = vmatprep.subr.mxu0 0.0
    %145 = vmatpush1.msra.mxu0 0.0
    %146 = vmatprep.subr.mxu0 0.0
    %147 = vmatpush1.msra.mxu0 0.0
    %148 = vmatprep.subr.mxu0 0.0
    %149 = vmatpush1.msra.mxu0 0.0
    %150 = vmatprep.subr.mxu0 0.0
    %151 = vmatpush1.msra.mxu0 0.0
    %152 = vmatprep.subr.mxu0 0.0
    %153 = vmatpush1.msra.mxu0 0.0
    %154 = vmatprep.subr.mxu0 0.0
    %155 = vmatpush1.msra.mxu0 0.0
    %156 = vmatprep.subr.mxu0 0.0
    %157 = vmatpush1.msra.mxu0 0.0
    %158 = vmatprep.subr.mxu0 0.0
    %159 = vmatpush1.msra.mxu0 0.0
    %160 = vmatprep.subr.mxu0 0.0
    %161 = vmatpush1.msra.mxu0 0.0
    %162 = vmatprep.subr.mxu0 0.0
    %163 = vmatpush1.msra.mxu0 0.0
    %164 = vmatprep.subr.mxu0 0.0
    %165 = vmatpush1.msra.mxu0 0.0
    %166 = vmatprep.subr.mxu0 0.0
    %167 = vmatpush1.msra.mxu0 0.0
    %168 = vmatprep.subr.mxu0 0.0
    %169 = vmatpush1.msra.mxu0 0.0
    %170 = vmatprep.subr.mxu0 0.0
    %171 = vmatpush1.msra.mxu0 0.0
    %172 = vmatprep.mubr.f32.mxu0 0.0
    %173 = vmatmul.mubr.f32.gmra.mrb[0].mxu0 %v76
    %v174 = vpop.f32.mrb[0].mxu0
    %v175 = vadd.f32 0.0, %v174
    %v176 = vpop.f32.mrb[0].mxu0
    %177 = vmatprep.mubr.f32.mxu0 0.0
    %178 = vmatmul.mubr.f32.gmra.mrb[0].mxu0 %v77
    %v179 = vpop.f32.mrb[0].mxu0
    %v180 = vadd.f32 0.0, %v179
    %v181 = vpop.f32.mrb[0].mxu0
    %182 = vmatprep.mubr.f32.mxu0 0.0
    %183 = vmatmul.mubr.f32.gmra.mrb[0].mxu0 %v78
    %v184 = vpop.f32.mrb[0].mxu0
    %v185 = vadd.f32 0.0, %v184
    %v186 = vpop.f32.mrb[0].mxu0
    %187 = vmatprep.mubr.f32.mxu0 0.0
    %188 = vmatmul.mubr.f32.gmra.mrb[0].mxu0 %v79
    %v189 = vpop.f32.mrb[0].mxu0
    %v190 = vadd.f32 0.0, %v189
    %v191 = vpop.f32.mrb[0].mxu0
    %192 = vmatprep.mubr.f32.mxu0 0.0
    %193 = vmatmul.mubr.f32.gmra.mrb[0].mxu0 %v80
    %v194 = vpop.f32.mrb[0].mxu0
    %v195 = vadd.f32 0.0, %v194
    %v196 = vpop.f32.mrb[0].mxu0
    %197 = vmatprep.mubr.f32.mxu0 0.0
    %198 = vmatmul.mubr.f32.gmra.mrb[0].mxu0 %v81
    %v199 = vpop.f32.mrb[0].mxu0
    %v200 = vadd.f32 0.0, %v199
    %v201 = vpop.f32.mrb[0].mxu0
    %202 = vmatprep.mubr.f32.mxu0 0.0
    %203 = vmatmul.mubr.f32.gmra.mrb[0].mxu0 %v82
    %v204 = vpop.f32.mrb[0].mxu0
    %v205 = vadd.f32 0.0, %v204
    %v206 = vpop.f32.mrb[0].mxu0
    %207 = vmatprep.mubr.f32.mxu0 0.0
    %208 = vmatmul.mubr.f32.gmra.mrb[0].mxu0 %v83
    %v209 = vpop.f32.mrb[0].mxu0
    %v210 = vadd.f32 0.0, %v209
    %v211 = vpop.f32.mrb[0].mxu0
    %212 = vmatprep.mubr.f32.mxu0 0.0
    %213 = vmatmul.mubr.f32.gmra.mrb[0].mxu0 %v84
    %v214 = vpop.f32.mrb[0].mxu0
    %v215 = vadd.f32 0.0, %v214
    %v216 = vpop.f32.mrb[0].mxu0
    %217 = vmatprep.mubr.f32.mxu0 0.0
    %218 = vmatmul.mubr.f32.gmra.mrb[0].mxu0 %v85
    %v219 = vpop.f32.mrb[0].mxu0
    %v220 = vadd.f32 0.0, %v219
    %v221 = vpop.f32.mrb[0].mxu0
    %222 = vmatprep.mubr.f32.mxu0 0.0
    %223 = vmatmul.mubr.f32.gmra.mrb[0].mxu0 %v86
    %v224 = vpop.f32.mrb[0].mxu0
    %v225 = vadd.f32 0.0, %v224
    %v226 = vpop.f32.mrb[0].mxu0
    %227 = vmatprep.mubr.f32.mxu0 0.0
    %228 = vmatmul.mubr.f32.gmra.mrb[0].mxu0 %v87
    %v229 = vpop.f32.mrb[0].mxu0
    %v230 = vadd.f32 0.0, %v229
    %v231 = vpop.f32.mrb[0].mxu0
    %232 = vmatprep.mubr.f32.mxu0 0.0
    %233 = vmatmul.mubr.f32.gmra.mrb[0].mxu0 %v88
    %v234 = vpop.f32.mrb[0].mxu0
    %v235 = vadd.f32 0.0, %v234
    %v236 = vpop.f32.mrb[0].mxu0
    %237 = vmatprep.mubr.f32.mxu0 0.0
    %238 = vmatmul.mubr.f32.gmra.mrb[0].mxu0 %v89
    %v239 = vpop.f32.mrb[0].mxu0
    %v240 = vadd.f32 0.0, %v239
    %v241 = vpop.f32.mrb[0].mxu0
    %242 = vmatprep.mubr.f32.mxu0 0.0
    %243 = vmatmul.mubr.f32.gmra.mrb[0].mxu0 %v90
    %v244 = vpop.f32.mrb[0].mxu0
    %v245 = vadd.f32 0.0, %v244
    %v246 = vpop.f32.mrb[0].mxu0
    %247 = vmatprep.mubr.f32.mxu0 0.0
    %248 = vmatmul.mubr.f32.gmra.mrb[0].mxu0 %v91
    %v249 = vpop.f32.mrb[0].mxu0
    %v250 = vadd.f32 0.0, %v249
    %v251 = vpop.f32.mrb[0].mxu0
    %252 = vdwg.mxu0
    %v253 = vadd.f32 %v60, %v175
    %v254 = vadd.f32 %v61, %v180
    %v255 = vadd.f32 %v62, %v185
    %v256 = vadd.f32 %v63, %v190
    %v257 = vadd.f32 %v64, %v195
    %v258 = vadd.f32 %v65, %v200
    %v259 = vadd.f32 %v66, %v205
    %v260 = vadd.f32 %v67, %v210
    %v261 = vadd.f32 %v68, %v215
    %v262 = vadd.f32 %v69, %v220
    %v263 = vadd.f32 %v70, %v225
    %v264 = vadd.f32 %v71, %v230
    %v265 = vadd.f32 %v72, %v235
    %v266 = vadd.f32 %v73, %v240
    %v267 = vadd.f32 %v74, %v245
    %v268 = vadd.f32 %v75, %v250
    %269 = vst [vmem:[#allocation2] sm:$0xff] %v253
    %270 = vst [vmem:[#allocation2 + $0x8] sm:$0xff] %v254
    %271 = vst [vmem:[#allocation2 + $0x10] sm:$0xff] %v255
    %272 = vst [vmem:[#allocation2 + $0x18] sm:$0xff] %v256
    %273 = vst [vmem:[#allocation2 + $0x20] sm:$0xff] %v257
    %274 = vst [vmem:[#allocation2 + $0x28] sm:$0xff] %v258
    %275 = vst [vmem:[#allocation2 + $0x30] sm:$0xff] %v259
    %276 = vst [vmem:[#allocation2 + $0x38] sm:$0xff] %v260
    %277 = vst [vmem:[#allocation2 + $0x40] sm:$0xff] %v261
    %278 = vst [vmem:[#allocation2 + $0x48] sm:$0xff] %v262
    %279 = vst [vmem:[#allocation2 + $0x50] sm:$0xff] %v263
    %280 = vst [vmem:[#allocation2 + $0x58] sm:$0xff] %v264
    %281 = vst [vmem:[#allocation2 + $0x60] sm:$0xff] %v265
    %282 = vst [vmem:[#allocation2 + $0x68] sm:$0xff] %v266
    %283 = vst [vmem:[#allocation2 + $0x70] sm:$0xff] %v267
    %284 = vst [vmem:[#allocation2 + $0x78] sm:$0xff] %v268
    %p285 = scmp.eq.s32.totalorder 0, 0
    // Predicated region
    $region22: #{tpu_custom_call.1} parent=1 // pred_check
      %p286 = pneg %p285
    $region23: #{tpu_custom_call.1} parent=1 // pred_check_branch
      %288 = sbr.rel (%p286) target = $region25
    $region24: #{tpu_custom_call.1} parent=1 // pred_region
      %v289 = vld [vmem:[#allocation2] sm:$0xff]
      %v290 = vld [vmem:[#allocation2 + $0x8] sm:$0xff]
      %v291 = vld [vmem:[#allocation2 + $0x10] sm:$0xff]
      %v292 = vld [vmem:[#allocation2 + $0x18] sm:$0xff]
      %v293 = vld [vmem:[#allocation2 + $0x20] sm:$0xff]
      %v294 = vld [vmem:[#allocation2 + $0x28] sm:$0xff]
      %v295 = vld [vmem:[#allocation2 + $0x30] sm:$0xff]
      %v296 = vld [vmem:[#allocation2 + $0x38] sm:$0xff]
      %v297 = vld [vmem:[#allocation2 + $0x40] sm:$0xff]
      %v298 = vld [vmem:[#allocation2 + $0x48] sm:$0xff]
      %v299 = vld [vmem:[#allocation2 + $0x50] sm:$0xff]
      %v300 = vld [vmem:[#allocation2 + $0x58] sm:$0xff]
      %v301 = vld [vmem:[#allocation2 + $0x60] sm:$0xff]
      %v302 = vld [vmem:[#allocation2 + $0x68] sm:$0xff]
      %v303 = vld [vmem:[#allocation2 + $0x70] sm:$0xff]
      %v304 = vld [vmem:[#allocation2 + $0x78] sm:$0xff]
      %v305 = vld [vmem:[#allocation6] sm:$0xff]
      %v306 = vld [vmem:[#allocation6 + $0x8] sm:$0xff]
      %v307 = vld [vmem:[#allocation6 + $0x10] sm:$0xff]
      %v308 = vld [vmem:[#allocation6 + $0x18] sm:$0xff]
      %v309 = vld [vmem:[#allocation6 + $0x20] sm:$0xff]
      %v310 = vld [vmem:[#allocation6 + $0x28] sm:$0xff]
      %v311 = vld [vmem:[#allocation6 + $0x30] sm:$0xff]
      %v312 = vld [vmem:[#allocation6 + $0x38] sm:$0xff]
      %v313 = vld [vmem:[#allocation6 + $0x40] sm:$0xff]
      %v314 = vld [vmem:[#allocation6 + $0x48] sm:$0xff]
      %v315 = vld [vmem:[#allocation6 + $0x50] sm:$0xff]
      %v316 = vld [vmem:[#allocation6 + $0x58] sm:$0xff]
      %v317 = vld [vmem:[#allocation6 + $0x60] sm:$0xff]
      %v318 = vld [vmem:[#allocation6 + $0x68] sm:$0xff]
      %v319 = vld [vmem:[#allocation6 + $0x70] sm:$0xff]
      %v320 = vld [vmem:[#allocation6 + $0x78] sm:$0xff]
      %v321 = vmul.f32 %v305, 3.0
      %v322 = vmul.f32 %v306, 3.0
      %v323 = vmul.f32 %v307, 3.0
      %v324 = vmul.f32 %v308, 3.0
      %v325 = vmul.f32 %v309, 3.0
      %v326 = vmul.f32 %v310, 3.0
      %v327 = vmul.f32 %v311, 3.0
      %v328 = vmul.f32 %v312, 3.0
      %v329 = vmul.f32 %v313, 3.0
      %v330 = vmul.f32 %v314, 3.0
      %v331 = vmul.f32 %v315, 3.0
      %v332 = vmul.f32 %v316, 3.0
      %v333 = vmul.f32 %v317, 3.0
      %v334 = vmul.f32 %v318, 3.0
      %v335 = vmul.f32 %v319, 3.0
      %v336 = vmul.f32 %v320, 3.0
      %v337 = vsub.f32 %v289, %v321
      %v338 = vsub.f32 %v290, %v322
      %v339 = vsub.f32 %v291, %v323
      %v340 = vsub.f32 %v292, %v324
      %v341 = vsub.f32 %v293, %v325
      %v342 = vsub.f32 %v294, %v326
      %v343 = vsub.f32 %v295, %v327
      %v344 = vsub.f32 %v296, %v328
      %v345 = vsub.f32 %v297, %v329
      %v346 = vsub.f32 %v298, %v330
      %v347 = vsub.f32 %v299, %v331
      %v348 = vsub.f32 %v300, %v332
      %v349 = vsub.f32 %v301, %v333
      %v350 = vsub.f32 %v302, %v334
      %v351 = vsub.f32 %v303, %v335
      %v352 = vsub.f32 %v304, %v336
      %353 = vst [vmem:[#allocation2] sm:$0xff] %v337
      %354 = vst [vmem:[#allocation2 + $0x8] sm:$0xff] %v338
      %355 = vst [vmem:[#allocation2 + $0x10] sm:$0xff] %v339
      %356 = vst [vmem:[#allocation2 + $0x18] sm:$0xff] %v340
      %357 = vst [vmem:[#allocation2 + $0x20] sm:$0xff] %v341
      %358 = vst [vmem:[#allocation2 + $0x28] sm:$0xff] %v342
      %359 = vst [vmem:[#allocation2 + $0x30] sm:$0xff] %v343
      %360 = vst [vmem:[#allocation2 + $0x38] sm:$0xff] %v344
      %361 = vst [vmem:[#allocation2 + $0x40] sm:$0xff] %v345
      %362 = vst [vmem:[#allocation2 + $0x48] sm:$0xff] %v346
      %363 = vst [vmem:[#allocation2 + $0x50] sm:$0xff] %v347
      %364 = vst [vmem:[#allocation2 + $0x58] sm:$0xff] %v348
      %365 = vst [vmem:[#allocation2 + $0x60] sm:$0xff] %v349
      %366 = vst [vmem:[#allocation2 + $0x68] sm:$0xff] %v350
      %367 = vst [vmem:[#allocation2 + $0x70] sm:$0xff] %v351
      %368 = vst [vmem:[#allocation2 + $0x78] sm:$0xff] %v352
    $region25: #{tpu_custom_call.1} parent=1 // pred_fallthru
      _
    // Predicated region
    $region26: #{tpu_custom_call.1} parent=1 // pred_check
      %p369 = pneg %p40
    $region27: #{tpu_custom_call.1} parent=1 // pred_check_branch
      %371 = sbr.rel (%p369) target = $region29
    $region28: #{tpu_custom_call.1} parent=1 // pred_region
      %v372 = vld [vmem:[#allocation2] sm:$0xff]
      %v373 = vld [vmem:[#allocation2 + $0x8] sm:$0xff]
      %v374 = vld [vmem:[#allocation2 + $0x10] sm:$0xff]
      %v375 = vld [vmem:[#allocation2 + $0x18] sm:$0xff]
      %v376 = vld [vmem:[#allocation2 + $0x20] sm:$0xff]
      %v377 = vld [vmem:[#allocation2 + $0x28] sm:$0xff]
      %v378 = vld [vmem:[#allocation2 + $0x30] sm:$0xff]
      %v379 = vld [vmem:[#allocation2 + $0x38] sm:$0xff]
      %v380 = vld [vmem:[#allocation2 + $0x40] sm:$0xff]
      %v381 = vld [vmem:[#allocation2 + $0x48] sm:$0xff]
      %v382 = vld [vmem:[#allocation2 + $0x50] sm:$0xff]
      %v383 = vld [vmem:[#allocation2 + $0x58] sm:$0xff]
      %v384 = vld [vmem:[#allocation2 + $0x60] sm:$0xff]
      %v385 = vld [vmem:[#allocation2 + $0x68] sm:$0xff]
      %v386 = vld [vmem:[#allocation2 + $0x70] sm:$0xff]
      %v387 = vld [vmem:[#allocation2 + $0x78] sm:$0xff]
      %v388 = vmul.f32 %v372, -0.5
      %v389 = vmul.f32 %v373, -0.5
      %v390 = vmul.f32 %v374, -0.5
      %v391 = vmul.f32 %v375, -0.5
      %v392 = vmul.f32 %v376, -0.5
      %v393 = vmul.f32 %v377, -0.5
      %v394 = vmul.f32 %v378, -0.5
      %v395 = vmul.f32 %v379, -0.5
      %v396 = vmul.f32 %v380, -0.5
      %v397 = vmul.f32 %v381, -0.5
      %v398 = vmul.f32 %v382, -0.5
      %v399 = vmul.f32 %v383, -0.5
      %v400 = vmul.f32 %v384, -0.5
      %v401 = vmul.f32 %v385, -0.5
      %v402 = vmul.f32 %v386, -0.5
      %v403 = vmul.f32 %v387, -0.5
      %404 = vst [vmem:[#allocation8] sm:$0xff] %v388
      %405 = vst [vmem:[#allocation8 + $0x8] sm:$0xff] %v389
      %406 = vst [vmem:[#allocation8 + $0x10] sm:$0xff] %v390
      %407 = vst [vmem:[#allocation8 + $0x18] sm:$0xff] %v391
      %408 = vst [vmem:[#allocation8 + $0x20] sm:$0xff] %v392
      %409 = vst [vmem:[#allocation8 + $0x28] sm:$0xff] %v393
      %410 = vst [vmem:[#allocation8 + $0x30] sm:$0xff] %v394
      %411 = vst [vmem:[#allocation8 + $0x38] sm:$0xff] %v395
      %412 = vst [vmem:[#allocation8 + $0x40] sm:$0xff] %v396
      %413 = vst [vmem:[#allocation8 + $0x48] sm:$0xff] %v397
      %414 = vst [vmem:[#allocation8 + $0x50] sm:$0xff] %v398
      %415 = vst [vmem:[#allocation8 + $0x58] sm:$0xff] %v399
      %416 = vst [vmem:[#allocation8 + $0x60] sm:$0xff] %v400
      %417 = vst [vmem:[#allocation8 + $0x68] sm:$0xff] %v401
      %418 = vst [vmem:[#allocation8 + $0x70] sm:$0xff] %v402
      %419 = vst [vmem:[#allocation8 + $0x78] sm:$0xff] %v403
    $region29: #{tpu_custom_call.1} parent=1 // pred_fallthru
      _
    // Predicated region
    $region30: #{tpu_custom_call.1} parent=1 // pred_check
      _
    $region31: #{tpu_custom_call.1} parent=1 // pred_check_branch
      %421 = sbr.rel (0) target = $region33
    $region32: #{tpu_custom_call.1} parent=1 // pred_region
      %s423 = ssub.s32 2048, 2048
      %424 = vsyncadd [#allocation5], %s423
      %s425 = sshll.u32 [#allocation8], 4
      %s426 = int_to_ptr.vmem [resolvable:$true] %s425
      %431 = dma.vmem_to_hbm [thread:$0]  %s426, 2048, %s2, [#allocation5], 128, 128, 8
    $region33: #{tpu_custom_call.1} parent=1 // pred_fallthru
      _
    // Predicated region
    $region34: #{tpu_custom_call.1} parent=1 // pred_check
      _
    $region35: #{tpu_custom_call.1} parent=1 // pred_check_branch
      %433 = sbr.rel (0) target = $region37
    $region36: #{tpu_custom_call.1} parent=1 // pred_region
      %434 = dma.done [#allocation5], 2048
    $region37: #{tpu_custom_call.1} parent=1 // pred_fallthru
      _
    %435 = vsyncpa [#allocation4], 1
    %436 = vsyncpa [#allocation7], 1
    %437 = vsyncpa [#allocation5], 1

</llo_original>
